<compile_context>
chip_gen: v7x
topology: tpu7x:2x2x1
jax: 0.10.0
libtpu: 0.0.40
codegen_flags: <defaults>
</compile_context>

<pallas_src>
import functools
import math

import jax
import jax.numpy as jnp
from jax.experimental import pallas as pl
from jax.experimental.pallas import tpu as pltpu

EMBED_LEN = 64  # embed_len from the PyTorch module; dk = embed_len

_FALLBACK_VMEM_BYTES = 64 << 20  # v7x per-TC capacity; safe floor for all gens


def _vmem_capacity_bytes():
    """Physical VMEM capacity of the local TPU generation (with a safe fallback)."""
    try:
        cap = int(pltpu.get_tpu_info().vmem_capacity_bytes)
        if cap > 0:
            return cap
    except Exception:
        pass
    return _FALLBACK_VMEM_BYTES


def _sdp_kernel(q_ref, k_ref, v_ref, o_ref, *, scale):
    # q_ref/k_ref/v_ref/o_ref: (BB, S, D) VMEM tiles covering BB batch elements.
    q = q_ref[...]          # native dtype -> MXU stays in native (e.g. bf16) mode
    k = k_ref[...]
    v = v_ref[...]

    # compatibility = Q @ K^T, contracting on D (no explicit transpose of K).
    s = jnp.einsum("bqd,bkd->bqk", q, k,
                   preferred_element_type=jnp.float32)          # (BB, S, S) f32
    s = s * scale                                               # exact, f32

    # numerically stable softmax along the last axis (== nn.Softmax(dim=-1)).
    m = jnp.max(s, axis=-1, keepdims=True)
    p = jnp.exp(s - m)
    denom = jnp.sum(p, axis=-1, keepdims=True)
    p = p * pl.reciprocal(denom, approx=False)                  # exact; EUP op, ~free

    # mask is None in the reference module -> no tril applied.
    out = jnp.einsum("bqk,bkd->bqd", p.astype(v.dtype), v,
                     preferred_element_type=jnp.float32)        # (BB, S, D) f32
    o_ref[...] = out.astype(o_ref.dtype)


def _choose_block_b(B, S, D, itemsize, *, vmem_budget_bytes, target_grid_steps=4):
    """Batch elements per grid step: as large as the VMEM budget allows, but
    capped so the grid keeps >= target_grid_steps steps (when B permits) so
    DMA prefetch/writeback can overlap compute."""
    # Per batch element, per step:
    #   double-buffered q/k/v/o tiles                : 2 * 4 * S * D * itemsize
    #   f32 score matrix + exp temporary (+ p cast)  : 3 * S * S * 4
    #   f32 output intermediate before the final cast: 2 * S * D * 4
    per_b = 2 * 4 * S * D * itemsize + 3 * S * S * 4 + 2 * S * D * 4
    bb_vmem = max(1, vmem_budget_bytes // per_b)
    bb_grid = max(1, B // target_grid_steps)   # keep several grid steps of work
    return max(1, min(B, bb_vmem, bb_grid))


def scaled_dot_product(queries, keys, values, *, block_b=None):
    """queries/keys/values: (B, S, D) -> (B, S, D). Matches the PyTorch module
    (no mask)."""
    B, S, D = queries.shape
    assert keys.shape == (B, S, D) and values.shape == (B, S, D)

    itemsize = queries.dtype.itemsize
    vmem_cap = _vmem_capacity_bytes()
    vmem_budget = vmem_cap // 2                 # tile footprint budget
    vmem_limit = (vmem_cap * 3) // 4            # compiler scratch headroom above budget

    if block_b is None:
        block_b = _choose_block_b(B, S, D, itemsize, vmem_budget_bytes=vmem_budget)
    block_b = max(1, min(block_b, B))

    # Pad B up to a multiple of block_b instead of shrinking block_b to a divisor.
    grid_b = pl.cdiv(B, block_b)
    B_pad = grid_b * block_b
    if B_pad != B:
        pad = ((0, B_pad - B), (0, 0), (0, 0))
        queries = jnp.pad(queries, pad)
        keys = jnp.pad(keys, pad)
        values = jnp.pad(values, pad)

    spec = pl.BlockSpec((block_b, S, D), lambda b: (b, 0, 0))
    kernel = functools.partial(_sdp_kernel, scale=1.0 / math.sqrt(D))

    cost = pl.CostEstimate(
        flops=2 * 2 * B * S * S * D,          # QK^T + PV
        transcendentals=B * S * S,            # exp
        bytes_accessed=4 * B * S * D * itemsize,
    )

    out = pl.pallas_call(
        kernel,
        out_shape=jax.ShapeDtypeStruct((B_pad, S, D), queries.dtype),
        grid_spec=pltpu.PrefetchScalarGridSpec(
            num_scalar_prefetch=0,
            grid=(grid_b,),
            in_specs=[spec, spec, spec],
            out_specs=spec,
        ),
        compiler_params=pltpu.CompilerParams(
            dimension_semantics=("parallel",),   # megacore / v7x 2-TC sharding
            vmem_limit_bytes=vmem_limit,
        ),
        cost_estimate=cost,
    )(queries, keys, values)

    if B_pad != B:
        out = out[:B]
    return out


def _reference(queries, keys, values):
    s = jnp.einsum("bqd,bkd->bqk", queries, keys) / math.sqrt(queries.shape[-1])
    p = jax.nn.softmax(s, axis=-1)
    return jnp.einsum("bqk,bkd->bqd", p, values)


if __name__ == "__main__":
    B, S, D = 2, 8, EMBED_LEN
    key = jax.random.PRNGKey(0)
    kq, kk, kv = jax.random.split(key, 3)
    q = jax.random.normal(kq, (B, S, D), dtype=jnp.float32)
    k = jax.random.normal(kk, (B, S, D), dtype=jnp.float32)
    v = jax.random.normal(kv, (B, S, D), dtype=jnp.float32)

    out = scaled_dot_product(q, k, v)
    jax.block_until_ready(out)

    ref = _reference(q, k, v)
    assert out.shape == (B, S, D)
    # exact reciprocal restores tight parity; small slack for f32 reduction order
    assert jnp.allclose(out, ref, atol=1e-4, rtol=1e-5), float(jnp.max(jnp.abs(out - ref)))

    print("KERNEL_OK")
</pallas_src>

<mosaic_0001>
module attributes {stable_mosaic.version = 11 : i64} {
  func.func @_sdp_kernel(%arg0: i32, %arg1: memref<1x8x64xf32, #tpu.memory_space<vmem>>, %arg2: memref<1x8x64xf32, #tpu.memory_space<vmem>>, %arg3: memref<1x8x64xf32, #tpu.memory_space<vmem>>, %arg4: memref<1x8x64xf32, #tpu.memory_space<vmem>>) attributes {dimension_semantics = [#tpu.dimension_semantics<parallel>], iteration_bounds = array<i64: 2>, scalar_prefetch = 0 : i64, scratch_operands = 0 : i64, tpu.core_type = #tpu.core_type<tc>, window_params = [{transform_indices = @transform_0, window_bounds = array<i64: 1, 8, 64>}, {transform_indices = @transform_1, window_bounds = array<i64: 1, 8, 64>}, {transform_indices = @transform_2, window_bounds = array<i64: 1, 8, 64>}, {transform_indices = @transform_3, window_bounds = array<i64: 1, 8, 64>}]} {
    %c0 = arith.constant 0 : index
    %c0_0 = arith.constant 0 : index
    %c0_1 = arith.constant 0 : index
    %0 = vector.load %arg1[%c0, %c0_0, %c0_1] : memref<1x8x64xf32, #tpu.memory_space<vmem>>, vector<1x8x64xf32>
    %c0_2 = arith.constant 0 : index
    %c0_3 = arith.constant 0 : index
    %c0_4 = arith.constant 0 : index
    %1 = vector.load %arg2[%c0_2, %c0_3, %c0_4] : memref<1x8x64xf32, #tpu.memory_space<vmem>>, vector<1x8x64xf32>
    %c0_5 = arith.constant 0 : index
    %c0_6 = arith.constant 0 : index
    %c0_7 = arith.constant 0 : index
    %2 = vector.load %arg3[%c0_5, %c0_6, %c0_7] : memref<1x8x64xf32, #tpu.memory_space<vmem>>, vector<1x8x64xf32>
    "tpu.trace_start"() <{level = 10 : i32, message = "bqd,bkd->bqk"}> : () -> ()
    %cst = arith.constant dense<0.000000e+00> : vector<1x8x8xf32>
    %3 = tpu.matmul %0, %1, %cst {dimension_numbers = #tpu.dot_dimension_numbers<[2], [2], [1], [1], [0, 0, 0, 1, 1, 1], [0], [0]>} : vector<1x8x64xf32>, vector<1x8x64xf32>, vector<1x8x8xf32> -> vector<1x8x8xf32>
    "tpu.trace_stop"() : () -> ()
    %cst_8 = arith.constant 1.250000e-01 : f32
    %4 = vector.broadcast %cst_8 : f32 to vector<1x8x8xf32>
    %5 = arith.mulf %3, %4 : vector<1x8x8xf32>
    %cst_9 = arith.constant dense<0xFF800000> : vector<1x8xf32>
    %6 = vector.multi_reduction <maximumf>, %5, %cst_9 [2] : vector<1x8x8xf32> to vector<1x8xf32>
    %7 = vector.shape_cast %6 : vector<1x8xf32> to vector<1x8x1xf32>
    %8 = vector.broadcast %7 : vector<1x8x1xf32> to vector<1x8x8xf32>
    %9 = arith.subf %5, %8 : vector<1x8x8xf32>
    %10 = math.exp %9 : vector<1x8x8xf32>
    %cst_10 = arith.constant dense<0.000000e+00> : vector<1x8xf32>
    %11 = vector.multi_reduction <add>, %10, %cst_10 [2] : vector<1x8x8xf32> to vector<1x8xf32>
    %12 = vector.shape_cast %11 : vector<1x8xf32> to vector<1x8x1xf32>
    %13 = tpu.reciprocal %12 : vector<1x8x1xf32> -> vector<1x8x1xf32>
    %14 = vector.broadcast %13 : vector<1x8x1xf32> to vector<1x8x8xf32>
    %15 = arith.mulf %10, %14 : vector<1x8x8xf32>
    "tpu.trace_start"() <{level = 10 : i32, message = "bqk,bkd->bqd"}> : () -> ()
    %cst_11 = arith.constant dense<0.000000e+00> : vector<1x8x64xf32>
    %16 = tpu.matmul %15, %2, %cst_11 {dimension_numbers = #tpu.dot_dimension_numbers<[2], [1], [1], [2], [0, 0, 0, 1, 1, 2], [0], [0]>} : vector<1x8x8xf32>, vector<1x8x64xf32>, vector<1x8x64xf32> -> vector<1x8x64xf32>
    "tpu.trace_stop"() : () -> ()
    %c0_12 = arith.constant 0 : index
    %c0_13 = arith.constant 0 : index
    %c0_14 = arith.constant 0 : index
    %17 = vector.load %arg4[%c0_12, %c0_13, %c0_14] : memref<1x8x64xf32, #tpu.memory_space<vmem>>, vector<1x8x64xf32>
    tpu.vector_store %arg4[%c0_12, %c0_13, %c0_14], %16 {strides = array<i32>} : memref<1x8x64xf32, #tpu.memory_space<vmem>>, vector<1x8x64xf32>,
    return
  }
  func.func @transform_0(%arg0: i32) -> (i32, i32, i32) {
    %c0_i32 = arith.constant 0 : i32
    %c0_i32_0 = arith.constant 0 : i32
    %c0_i32_1 = arith.constant 0 : i32
    return %arg0, %c0_i32, %c0_i32_0 : i32, i32, i32
  }
  func.func @transform_1(%arg0: i32) -> (i32, i32, i32) {
    %c0_i32 = arith.constant 0 : i32
    %c0_i32_0 = arith.constant 0 : i32
    %c0_i32_1 = arith.constant 0 : i32
    return %arg0, %c0_i32, %c0_i32_0 : i32, i32, i32
  }
  func.func @transform_2(%arg0: i32) -> (i32, i32, i32) {
    %c0_i32 = arith.constant 0 : i32
    %c0_i32_0 = arith.constant 0 : i32
    %c0_i32_1 = arith.constant 0 : i32
    return %arg0, %c0_i32, %c0_i32_0 : i32, i32, i32
  }
  func.func @transform_3(%arg0: i32) -> (i32, i32, i32) {
    %c0_i32 = arith.constant 0 : i32
    %c0_i32_0 = arith.constant 0 : i32
    %c0_i32_1 = arith.constant 0 : i32
    return %arg0, %c0_i32, %c0_i32_0 : i32, i32, i32
  }
}

</mosaic_0001>

<llo_original>
// kernel: tpu_custom_call.1
$region0: #{tpu_custom_call.1}
  #allocation0 [shape = 'u32[]', space=smem, size = 0x4, offset = 0x4, fixed_abs, tag = 'smem constant byte address 0x4 - core index']
  #allocation1 [shape = 'u32[144,128]{1,0:T(1,128)}', space=vmem, size = 0x12000, scoped, tag = 'internal scratch']
  %s0 = inlined_call_operand.hbm [shape: f32[2,8,64], index: 0, kind: input, shape index: {}]
  %s1 = inlined_call_operand.hbm [shape: f32[2,8,64], index: 1, kind: input, shape index: {}]
  %s2 = inlined_call_operand.hbm [shape: f32[2,8,64], index: 2, kind: input, shape index: {}]
  %s3 = inlined_call_operand.hbm [shape: f32[2,8,64], index: 3, kind: output, shape index: {}]
  %s4 = sld [smem:[#allocation0]]
  $region57: #{tpu_custom_call.1} parent=0
    _
  %s6 = ssub.s32 1, %s4
  %s7 = scalar_select 0, %s6, %s4
  $region1: #{tpu_custom_call.1} parent=0
    #allocation2 [shape = 'u8[8192]{0}', space=vmem, size = 0x2000, scoped, tag = 'input window, operand 0']
    #allocation3 [shape = 's32[2]{0}', space=sflag, size = 0x8, scoped, tag = 'scoped memory for tpu_custom_call.1']
    #allocation4 [shape = 's32[2]{0}', space=sflag, size = 0x8, scoped, tag = 'scoped memory for tpu_custom_call.1']
    #allocation5 [shape = 'u8[8192]{0}', space=vmem, size = 0x2000, scoped, tag = 'input window, operand 1']
    #allocation6 [shape = 's32[2]{0}', space=sflag, size = 0x8, scoped, tag = 'scoped memory for tpu_custom_call.1']
    #allocation7 [shape = 'u8[8192]{0}', space=vmem, size = 0x2000, scoped, tag = 'input window, operand 2']
    #allocation8 [shape = 'u8[8192]{0}', space=vmem, size = 0x2000, scoped, tag = 'output window, operand 0']
    %8 = vsyncpa [#allocation3], 0
    %s9 = scalar_lea.sflag [#allocation3], 1
    %10 = vsyncpa %s9, 0
    %11 = vsyncpa [#allocation6], 0
    %s12 = scalar_lea.sflag [#allocation6], 1
    %13 = vsyncpa %s12, 0
    %14 = vsyncpa [#allocation4], 0
    %s15 = scalar_lea.sflag [#allocation4], 1
    %16 = vsyncpa %s15, 0
    loop: start=0, step=1, limit=4
    $region2: #{tpu_custom_call.1} parent=1 // loop_pre_header
      _
    $region3: #{tpu_custom_call.1} parent=1 // loop_header
      %s18 = sphi 0, %s22
      %p19 = scmp.ge.s32.totalorder %s18, 4
      %s28 = sphi 0, %s30
      %s31 = sphi 0, %s28
      %s32 = sphi 0, %s31
      %s48 = sphi 0, %s32
      %s54 = sphi 0, %s56
      %s57 = sphi 0, %s54
      %s58 = sphi 0, %s57
      %s74 = sphi 0, %s58
      %s80 = sphi 0, %s82
      %s83 = sphi 0, %s80
      %s84 = sphi 0, %s83
      %s100 = sphi 0, %s84
      %s106 = sphi 0, %s108
      %s109 = sphi 0, %s106
      %s110 = sphi 0, %s109
      %s126 = sphi 0, %s110
    $region4: #{tpu_custom_call.1} parent=1 // loop_header_branch
      %21 = sbr.rel (%p19) target = $region8
    $region5: #{tpu_custom_call.1} parent=1 // loop_body
      %s23 = ssub.s32 %s18, 1
      %s24 = ssub.s32 %s18, 2
      %s25 = sadd.s32 %s18, 1
      %s26 = ssub.s32 %s18, %s25
      %p27 = scmp.eq.s32.totalorder %s26, 0
      %s29 = sadd.s32 %s28, 1
      %s30 = scalar_select %p27, %s28, %s29
      %p33 = pneg %p27
      %p34 = scmp.eq.s32.totalorder %s18, 1
      %p35 = por %p33, %p34
      %p36 = scmp.ne.s32.totalorder %s28, %s31
      %p37 = scmp.eq.s32.totalorder %s18, 0
      %p38 = por %p36, %p37
      %p39 = scmp.ne.s32.totalorder %s28, %s31
      %p40 = scmp.eq.s32.totalorder %s23, 1
      %p41 = por %p39, %p40
      %p42 = scmp.ne.s32.totalorder %s31, %s32
      %p43 = scmp.eq.s32.totalorder %s23, 0
      %p44 = por %p42, %p43
      %p45 = scmp.ne.s32.totalorder %s31, %s32
      %p46 = scmp.eq.s32.totalorder %s24, 1
      %p47 = por %p45, %p46
      %p49 = scmp.ne.s32.totalorder %s32, %s48
      %p50 = scmp.eq.s32.totalorder %s24, 0
      %p51 = por %p49, %p50
      %s52 = ssub.s32 %s18, %s25
      %p53 = scmp.eq.s32.totalorder %s52, 0
      %s55 = sadd.s32 %s54, 1
      %s56 = scalar_select %p53, %s54, %s55
      %p59 = pneg %p53
      %p60 = scmp.eq.s32.totalorder %s18, 1
      %p61 = por %p59, %p60
      %p62 = scmp.ne.s32.totalorder %s54, %s57
      %p63 = scmp.eq.s32.totalorder %s18, 0
      %p64 = por %p62, %p63
      %p65 = scmp.ne.s32.totalorder %s54, %s57
      %p66 = scmp.eq.s32.totalorder %s23, 1
      %p67 = por %p65, %p66
      %p68 = scmp.ne.s32.totalorder %s57, %s58
      %p69 = scmp.eq.s32.totalorder %s23, 0
      %p70 = por %p68, %p69
      %p71 = scmp.ne.s32.totalorder %s57, %s58
      %p72 = scmp.eq.s32.totalorder %s24, 1
      %p73 = por %p71, %p72
      %p75 = scmp.ne.s32.totalorder %s58, %s74
      %p76 = scmp.eq.s32.totalorder %s24, 0
      %p77 = por %p75, %p76
      %s78 = ssub.s32 %s18, %s25
      %p79 = scmp.eq.s32.totalorder %s78, 0
      %s81 = sadd.s32 %s80, 1
      %s82 = scalar_select %p79, %s80, %s81
      %p85 = pneg %p79
      %p86 = scmp.eq.s32.totalorder %s18, 1
      %p87 = por %p85, %p86
      %p88 = scmp.ne.s32.totalorder %s80, %s83
      %p89 = scmp.eq.s32.totalorder %s18, 0
      %p90 = por %p88, %p89
      %p91 = scmp.ne.s32.totalorder %s80, %s83
      %p92 = scmp.eq.s32.totalorder %s23, 1
      %p93 = por %p91, %p92
      %p94 = scmp.ne.s32.totalorder %s83, %s84
      %p95 = scmp.eq.s32.totalorder %s23, 0
      %p96 = por %p94, %p95
      %p97 = scmp.ne.s32.totalorder %s83, %s84
      %p98 = scmp.eq.s32.totalorder %s24, 1
      %p99 = por %p97, %p98
      %p101 = scmp.ne.s32.totalorder %s84, %s100
      %p102 = scmp.eq.s32.totalorder %s24, 0
      %p103 = por %p101, %p102
      %s104 = ssub.s32 %s18, %s25
      %p105 = scmp.eq.s32.totalorder %s104, 0
      %s107 = sadd.s32 %s106, 1
      %s108 = scalar_select %p105, %s106, %s107
      %p111 = pneg %p105
      %p112 = scmp.eq.s32.totalorder %s18, 1
      %p113 = por %p111, %p112
      %p114 = scmp.ne.s32.totalorder %s106, %s109
      %p115 = scmp.eq.s32.totalorder %s18, 0
      %p116 = por %p114, %p115
      %p117 = scmp.ne.s32.totalorder %s106, %s109
      %p118 = scmp.eq.s32.totalorder %s23, 1
      %p119 = por %p117, %p118
      %p120 = scmp.ne.s32.totalorder %s109, %s110
      %p121 = scmp.eq.s32.totalorder %s23, 0
      %p122 = por %p120, %p121
      %p123 = scmp.ne.s32.totalorder %s109, %s110
      %p124 = scmp.eq.s32.totalorder %s24, 1
      %p125 = por %p123, %p124
      %p127 = scmp.ne.s32.totalorder %s110, %s126
      %p128 = scmp.eq.s32.totalorder %s24, 0
      %p129 = por %p127, %p128
      %p130 = scmp.le.s32.totalorder 1, %s18
      %p131 = scmp.lt.s32.totalorder %s18, 3
      %p132 = pnand %p130, %p131
      %p133 = pneg %p132
      // Predicated region
      $region9: #{tpu_custom_call.1} parent=5 // pred_check
        _
      $region10: #{tpu_custom_call.1} parent=5 // pred_check_branch
        %135 = sbr.rel (%p132) target = $region12
      $region11: #{tpu_custom_call.1} parent=5 // pred_region
        %s136 = ssub.s32 %s18, 1
      $region12: #{tpu_custom_call.1} parent=5 // pred_fallthru
        _
      %p137 = scmp.lt.s32.totalorder %s18, 2
      // Predicated region
      $region13: #{tpu_custom_call.1} parent=5 // pred_check
        %p138 = pneg %p137
      $region14: #{tpu_custom_call.1} parent=5 // pred_check_branch
        %140 = sbr.rel (%p138) target = $region16
      $region15: #{tpu_custom_call.1} parent=5 // pred_region
        // Predicated region
        $region17: #{tpu_custom_call.1} parent=15 // pred_check
          %p141 = pneg %p38
        $region18: #{tpu_custom_call.1} parent=15 // pred_check_branch
          %143 = sbr.rel (%p141) target = $region20
        $region19: #{tpu_custom_call.1} parent=15 // pred_region
          %s144 = sand.u32 %s28, 1
          %s145 = scalar_lea.sflag [#allocation3], %s144
          %s146 = sand.u32 %s28, 1
          %s147 = smul.addr %s146, 8
          %s148 = scalar_lea.vmem [#allocation2], %s147
          %s150 = ssub.s32 128, 128
          %151 = vsyncadd %s145, %s150
          %s152 = smul.addr %s18, 128
          %s153 = scalar_lea.hbm %s0, %s152
          %s155 = sshll.u32 %s148, 4
          %s156 = int_to_ptr.vmem [resolvable:$true] %s155
          %158 = dma.hbm_to_vmem [thread:$0]  %s153, 128, %s156, %s145
        $region20: #{tpu_custom_call.1} parent=15 // pred_fallthru
          _
        // Predicated region
        $region21: #{tpu_custom_call.1} parent=15 // pred_check
          %p159 = pneg %p64
        $region22: #{tpu_custom_call.1} parent=15 // pred_check_branch
          %161 = sbr.rel (%p159) target = $region24
        $region23: #{tpu_custom_call.1} parent=15 // pred_region
          %s162 = sand.u32 %s18, 1
          %s163 = scalar_lea.sflag [#allocation6], %s162
          %s164 = sand.u32 %s54, 1
          %s165 = smul.addr %s164, 8
          %s166 = scalar_lea.vmem [#allocation5], %s165
          %s168 = ssub.s32 128, 128
          %169 = vsyncadd %s163, %s168
          %s170 = smul.addr %s18, 128
          %s171 = scalar_lea.hbm %s1, %s170
          %s173 = sshll.u32 %s166, 4
          %s174 = int_to_ptr.vmem [resolvable:$true] %s173
          %176 = dma.hbm_to_vmem [thread:$0]  %s171, 128, %s174, %s163
        $region24: #{tpu_custom_call.1} parent=15 // pred_fallthru
          _
        // Predicated region
        $region25: #{tpu_custom_call.1} parent=15 // pred_check
          %p177 = pneg %p90
        $region26: #{tpu_custom_call.1} parent=15 // pred_check_branch
          %179 = sbr.rel (%p177) target = $region28
        $region27: #{tpu_custom_call.1} parent=15 // pred_region
          %s180 = sand.u32 %s18, 1
          %s181 = scalar_lea.sflag [#allocation6], %s180
          %s182 = sand.u32 %s80, 1
          %s183 = smul.addr %s182, 8
          %s184 = scalar_lea.vmem [#allocation7], %s183
          %s186 = ssub.s32 128, 128
          %187 = vsyncadd %s181, %s186
          %s188 = smul.addr %s18, 128
          %s189 = scalar_lea.hbm %s2, %s188
          %s191 = sshll.u32 %s184, 4
          %s192 = int_to_ptr.vmem [resolvable:$true] %s191
          %194 = dma.hbm_to_vmem [thread:$0]  %s189, 128, %s192, %s181
        $region28: #{tpu_custom_call.1} parent=15 // pred_fallthru
          _
      $region16: #{tpu_custom_call.1} parent=5 // pred_fallthru
        _
      %p195 = scmp.le.s32.totalorder 1, %s18
      %p196 = scmp.lt.s32.totalorder %s18, 3
      %p197 = pnand %p195, %p196
      %p198 = pneg %p197
      // Predicated region
      $region29: #{tpu_custom_call.1} parent=5 // pred_check
        _
      $region30: #{tpu_custom_call.1} parent=5 // pred_check_branch
        %200 = sbr.rel (%p197) target = $region32
      $region31: #{tpu_custom_call.1} parent=5 // pred_region
        %s201 = ssub.s32 %s18, 1
        %s202 = sand.u32 %s31, 1
        %s203 = scalar_lea.sflag [#allocation3], %s202
        %s204 = sand.u32 %s31, 1
        %s205 = smul.addr %s204, 8
        %s206 = scalar_lea.vmem [#allocation2], %s205
        // Predicated region
        $region33: #{tpu_custom_call.1} parent=31 // pred_check
          %p207 = pneg %p44
        $region34: #{tpu_custom_call.1} parent=31 // pred_check_branch
          %209 = sbr.rel (%p207) target = $region36
        $region35: #{tpu_custom_call.1} parent=31 // pred_region
          %210 = dma.done %s203, 128
        $region36: #{tpu_custom_call.1} parent=31 // pred_fallthru
          _
        %s211 = sand.u32 %s23, 1
        %s212 = scalar_lea.sflag [#allocation6], %s211
        %s213 = sand.u32 %s57, 1
        %s214 = smul.addr %s213, 8
        %s215 = scalar_lea.vmem [#allocation5], %s214
        // Predicated region
        $region37: #{tpu_custom_call.1} parent=31 // pred_check
          %p216 = pneg %p70
        $region38: #{tpu_custom_call.1} parent=31 // pred_check_branch
          %218 = sbr.rel (%p216) target = $region40
        $region39: #{tpu_custom_call.1} parent=31 // pred_region
          %219 = dma.done %s212, 128
        $region40: #{tpu_custom_call.1} parent=31 // pred_fallthru
          _
        %s220 = sand.u32 %s23, 1
        %s221 = scalar_lea.sflag [#allocation6], %s220
        %s222 = sand.u32 %s83, 1
        %s223 = smul.addr %s222, 8
        %s224 = scalar_lea.vmem [#allocation7], %s223
        // Predicated region
        $region41: #{tpu_custom_call.1} parent=31 // pred_check
          %p225 = pneg %p96
        $region42: #{tpu_custom_call.1} parent=31 // pred_check_branch
          %227 = sbr.rel (%p225) target = $region44
        $region43: #{tpu_custom_call.1} parent=31 // pred_region
          %228 = dma.done %s221, 128
        $region44: #{tpu_custom_call.1} parent=31 // pred_fallthru
          _
        %s229 = sand.u32 %s31, 1
        %s230 = scalar_lea.sflag [#allocation3], %s229
        %s231 = sand.u32 %s31, 1
        %s232 = smul.addr %s231, 8
        %s233 = scalar_lea.vmem [#allocation2], %s232
        %p234 = pneg %p44
        %p235 = pneg %p41
        %s236 = sand.u32 %s23, 1
        %s237 = scalar_lea.sflag [#allocation6], %s236
        %s238 = sand.u32 %s57, 1
        %s239 = smul.addr %s238, 8
        %s240 = scalar_lea.vmem [#allocation5], %s239
        %p241 = pneg %p70
        %p242 = pneg %p67
        %s243 = sand.u32 %s23, 1
        %s244 = scalar_lea.sflag [#allocation6], %s243
        %s245 = sand.u32 %s83, 1
        %s246 = smul.addr %s245, 8
        %s247 = scalar_lea.vmem [#allocation7], %s246
        %p248 = pneg %p96
        %p249 = pneg %p93
        %p250 = pneg %p122
        %p251 = pneg %p119
        %s252 = sand.u32 %s109, 1
        %s253 = scalar_lea.sflag [#allocation4], %s252
        %s254 = sand.u32 %s109, 1
        %s255 = smul.addr %s254, 8
        %s256 = scalar_lea.vmem [#allocation8], %s255
        %v257 = vld [vmem:[%s206] sm:$0xff]
        %v258 = vld [vmem:[%s215] sm:$0xff]
        %v259 = vld [vmem:[%s224] sm:$0xff]
        %vm260 = vcmask 523264
        %v262 = vsel %vm260, %v257, 0
        %v265 = vsel %vm260, %v258, 0
        %267 = vmatprep.subr.mxu0 0.0
        %268 = vmatpush1.xpose.msra.mxu0 %v265
        %269 = vmatprep.subr.mxu0 0.0
        %270 = vmatpush1.xpose.msra.mxu0 0.0
        %271 = vmatprep.subr.mxu0 0.0
        %272 = vmatpush1.xpose.msra.mxu0 0.0
        %273 = vmatprep.subr.mxu0 0.0
        %274 = vmatpush1.xpose.msra.mxu0 0.0
        %275 = vmatprep.subr.mxu0 0.0
        %276 = vmatpush1.xpose.msra.mxu0 0.0
        %277 = vmatprep.subr.mxu0 0.0
        %278 = vmatpush1.xpose.msra.mxu0 0.0
        %279 = vmatprep.subr.mxu0 0.0
        %280 = vmatpush1.xpose.msra.mxu0 0.0
        %281 = vmatprep.subr.mxu0 0.0
        %282 = vmatpush1.xpose.msra.mxu0 0.0
        %283 = vmatprep.subr.mxu0 0.0
        %284 = vmatpush1.xpose.msra.mxu0 0.0
        %285 = vmatprep.subr.mxu0 0.0
        %286 = vmatpush1.xpose.msra.mxu0 0.0
        %287 = vmatprep.subr.mxu0 0.0
        %288 = vmatpush1.xpose.msra.mxu0 0.0
        %289 = vmatprep.subr.mxu0 0.0
        %290 = vmatpush1.xpose.msra.mxu0 0.0
        %291 = vmatprep.subr.mxu0 0.0
        %292 = vmatpush1.xpose.msra.mxu0 0.0
        %293 = vmatprep.subr.mxu0 0.0
        %294 = vmatpush1.xpose.msra.mxu0 0.0
        %295 = vmatprep.subr.mxu0 0.0
        %296 = vmatpush1.xpose.msra.mxu0 0.0
        %297 = vmatprep.subr.mxu0 0.0
        %298 = vmatpush1.xpose.msra.mxu0 0.0
        %299 = vmatprep.subr.mxu0 0.0
        %300 = vmatpush1.xpose.msra.mxu0 0.0
        %301 = vmatprep.subr.mxu0 0.0
        %302 = vmatpush1.xpose.msra.mxu0 0.0
        %303 = vmatprep.subr.mxu0 0.0
        %304 = vmatpush1.xpose.msra.mxu0 0.0
        %305 = vmatprep.subr.mxu0 0.0
        %306 = vmatpush1.xpose.msra.mxu0 0.0
        %307 = vmatprep.subr.mxu0 0.0
        %308 = vmatpush1.xpose.msra.mxu0 0.0
        %309 = vmatprep.subr.mxu0 0.0
        %310 = vmatpush1.xpose.msra.mxu0 0.0
        %311 = vmatprep.subr.mxu0 0.0
        %312 = vmatpush1.xpose.msra.mxu0 0.0
        %313 = vmatprep.subr.mxu0 0.0
        %314 = vmatpush1.xpose.msra.mxu0 0.0
        %315 = vmatprep.subr.mxu0 0.0
        %316 = vmatpush1.xpose.msra.mxu0 0.0
        %317 = vmatprep.subr.mxu0 0.0
        %318 = vmatpush1.xpose.msra.mxu0 0.0
        %319 = vmatprep.subr.mxu0 0.0
        %320 = vmatpush1.xpose.msra.mxu0 0.0
        %321 = vmatprep.subr.mxu0 0.0
        %322 = vmatpush1.xpose.msra.mxu0 0.0
        %323 = vmatprep.subr.mxu0 0.0
        %324 = vmatpush1.xpose.msra.mxu0 0.0
        %325 = vmatprep.subr.mxu0 0.0
        %326 = vmatpush1.xpose.msra.mxu0 0.0
        %327 = vmatprep.subr.mxu0 0.0
        %328 = vmatpush1.xpose.msra.mxu0 0.0
        %329 = vmatprep.subr.mxu0 0.0
        %330 = vmatpush1.xpose.msra.mxu0 0.0
        %331 = vmatprep.mubr.f32.mxu0 0.0
        %332 = vmatmul.mubr.f32.gmra.mrb[0].mxu0 %v262
        %v333 = vpop.f32.mrb[0].mxu0
        %v334 = vadd.f32 0.0, %v333
        %v335 = vpop.f32.mrb[0].mxu0
        %336 = vdwg.mxu0
        %v337 = vmul.f32 %v334, 0.125
        %vm338 = vcmask 64512
        %v339 = vsel %vm338, %v337, -inf
        %340 = vmax.xlane.f32.xlu0 %v339
        %v341 = vpop.xlane.xlu0 %340
        %v342 = vsub.f32 %v337, %v341
        %v343 = vmul.f32 %v342, 1.442695
        %v344 = vpow.pop %v343
        %v345 = vsel %vm338, %v344, 0.0
        %346 = vadd.xlane.f32.xlu0 %v345
        %v347 = vpop.xlane.xlu0 %346
        %v348 = vrcp.pop %v347
        %v349 = vmul.f32 %v344, %v348
        %v351 = vsel %vm338, %v349, 0
        %353 = vmatprep.subr.mxu0 0.0
        %354 = vmatpush1.msra.mxu0 %v259
        %355 = vmatprep.subr.mxu0 0.0
        %356 = vmatpush1.msra.mxu0 0.0
        %357 = vmatprep.subr.mxu0 0.0
        %358 = vmatpush1.msra.mxu0 0.0
        %359 = vmatprep.subr.mxu0 0.0
        %360 = vmatpush1.msra.mxu0 0.0
        %361 = vmatprep.subr.mxu0 0.0
        %362 = vmatpush1.msra.mxu0 0.0
        %363 = vmatprep.subr.mxu0 0.0
        %364 = vmatpush1.msra.mxu0 0.0
        %365 = vmatprep.subr.mxu0 0.0
        %366 = vmatpush1.msra.mxu0 0.0
        %367 = vmatprep.subr.mxu0 0.0
        %368 = vmatpush1.msra.mxu0 0.0
        %369 = vmatprep.subr.mxu0 0.0
        %370 = vmatpush1.msra.mxu0 0.0
        %371 = vmatprep.subr.mxu0 0.0
        %372 = vmatpush1.msra.mxu0 0.0
        %373 = vmatprep.subr.mxu0 0.0
        %374 = vmatpush1.msra.mxu0 0.0
        %375 = vmatprep.subr.mxu0 0.0
        %376 = vmatpush1.msra.mxu0 0.0
        %377 = vmatprep.subr.mxu0 0.0
        %378 = vmatpush1.msra.mxu0 0.0
        %379 = vmatprep.subr.mxu0 0.0
        %380 = vmatpush1.msra.mxu0 0.0
        %381 = vmatprep.subr.mxu0 0.0
        %382 = vmatpush1.msra.mxu0 0.0
        %383 = vmatprep.subr.mxu0 0.0
        %384 = vmatpush1.msra.mxu0 0.0
        %385 = vmatprep.subr.mxu0 0.0
        %386 = vmatpush1.msra.mxu0 0.0
        %387 = vmatprep.subr.mxu0 0.0
        %388 = vmatpush1.msra.mxu0 0.0
        %389 = vmatprep.subr.mxu0 0.0
        %390 = vmatpush1.msra.mxu0 0.0
        %391 = vmatprep.subr.mxu0 0.0
        %392 = vmatpush1.msra.mxu0 0.0
        %393 = vmatprep.subr.mxu0 0.0
        %394 = vmatpush1.msra.mxu0 0.0
        %395 = vmatprep.subr.mxu0 0.0
        %396 = vmatpush1.msra.mxu0 0.0
        %397 = vmatprep.subr.mxu0 0.0
        %398 = vmatpush1.msra.mxu0 0.0
        %399 = vmatprep.subr.mxu0 0.0
        %400 = vmatpush1.msra.mxu0 0.0
        %401 = vmatprep.subr.mxu0 0.0
        %402 = vmatpush1.msra.mxu0 0.0
        %403 = vmatprep.subr.mxu0 0.0
        %404 = vmatpush1.msra.mxu0 0.0
        %405 = vmatprep.subr.mxu0 0.0
        %406 = vmatpush1.msra.mxu0 0.0
        %407 = vmatprep.subr.mxu0 0.0
        %408 = vmatpush1.msra.mxu0 0.0
        %409 = vmatprep.subr.mxu0 0.0
        %410 = vmatpush1.msra.mxu0 0.0
        %411 = vmatprep.subr.mxu0 0.0
        %412 = vmatpush1.msra.mxu0 0.0
        %413 = vmatprep.subr.mxu0 0.0
        %414 = vmatpush1.msra.mxu0 0.0
        %415 = vmatprep.subr.mxu0 0.0
        %416 = vmatpush1.msra.mxu0 0.0
        %417 = vmatprep.mubr.f32.mxu0 0.0
        %418 = vmatmul.mubr.f32.gmra.mrb[0].mxu0 %v351
        %v419 = vpop.f32.mrb[0].mxu0
        %v420 = vadd.f32 0.0, %v419
        %v421 = vpop.f32.mrb[0].mxu0
        %422 = vdwg.mxu0
        %423 = vst.msk [vmem:[%s256] sm:$0xff] %vm260, %v420
        %s424 = sand.u32 %s109, 1
        %s425 = scalar_lea.sflag [#allocation4], %s424
        %s426 = sand.u32 %s109, 1
        %s427 = smul.addr %s426, 8
        %s428 = scalar_lea.vmem [#allocation8], %s427
        // Predicated region
        $region45: #{tpu_custom_call.1} parent=31 // pred_check
          %p429 = pneg %p119
        $region46: #{tpu_custom_call.1} parent=31 // pred_check_branch
          %431 = sbr.rel (%p429) target = $region48
        $region47: #{tpu_custom_call.1} parent=31 // pred_region
          %s433 = ssub.s32 128, 128
          %434 = vsyncadd %s425, %s433
          %s435 = smul.addr %s23, 128
          %s436 = scalar_lea.hbm %s3, %s435
          %s438 = sshll.u32 %s428, 4
          %s439 = int_to_ptr.vmem [resolvable:$true] %s438
          %441 = dma.vmem_to_hbm [thread:$0]  %s439, 128, %s436, %s425
        $region48: #{tpu_custom_call.1} parent=31 // pred_fallthru
          _
      $region32: #{tpu_custom_call.1} parent=5 // pred_fallthru
        _
      %p442 = scmp.le.s32.totalorder 2, %s18
      // Predicated region
      $region49: #{tpu_custom_call.1} parent=5 // pred_check
        %p443 = pneg %p442
      $region50: #{tpu_custom_call.1} parent=5 // pred_check_branch
        %445 = sbr.rel (%p443) target = $region52
      $region51: #{tpu_custom_call.1} parent=5 // pred_region
        %s446 = ssub.s32 %s18, 2
        // Predicated region
        $region53: #{tpu_custom_call.1} parent=51 // pred_check
          %p447 = pneg %p125
        $region54: #{tpu_custom_call.1} parent=51 // pred_check_branch
          %449 = sbr.rel (%p447) target = $region56
        $region55: #{tpu_custom_call.1} parent=51 // pred_region
          %s450 = sand.u32 %s110, 1
          %s451 = scalar_lea.sflag [#allocation4], %s450
          %s452 = sand.u32 %s110, 1
          %s453 = smul.addr %s452, 8
          %s454 = scalar_lea.vmem [#allocation8], %s453
          %455 = dma.done %s451, 128
        $region56: #{tpu_custom_call.1} parent=51 // pred_fallthru
          _
      $region52: #{tpu_custom_call.1} parent=5 // pred_fallthru
        _
    $region6: #{tpu_custom_call.1} parent=1 // loop_footer
      %s22 = sadd.s32 1, %s18
    $region7: #{tpu_custom_call.1} parent=1 // loop_footer_branch
      %17 = sbr.rel target = $region3
    $region8: #{tpu_custom_call.1} parent=1 // loop_exit
      _
    %456 = vsyncpa [#allocation3], 1
    %s457 = scalar_lea.sflag [#allocation3], 1
    %458 = vsyncpa %s457, 1
    %459 = vsyncpa [#allocation6], 1
    %s460 = scalar_lea.sflag [#allocation6], 1
    %461 = vsyncpa %s460, 1
    %462 = vsyncpa [#allocation4], 1
    %s463 = scalar_lea.sflag [#allocation4], 1
    %464 = vsyncpa %s463, 1

</llo_original>
